<compile_context>
chip_gen: v6e
topology: v6e:2x2x1
jax: 0.10.0
libtpu: 0.0.40
codegen_flags: <defaults>
</compile_context>

<pallas_src>
import functools

import jax
import jax.numpy as jnp
from jax import lax
from jax.experimental import pallas as pl
from jax.experimental.pallas import tpu as pltpu

LANES = 128
TILE_ROWS = 4096                 # 4096*128*4 B = 2 MiB per f32 input block
_MIN_PALLAS_BYTES = 4 * 1024 * 1024   # below this, plain XLA wins
_MIN_ROWS = 64                   # short rows per sample -> plain XLA


def _dice_kernel(x_ref, t_ref, num_ref, den_ref, num_acc, den_acc, *,
                 p, n_valid, mask_needed):
    """Fused sigmoid + Dice num/den reduction for one (split, batch) slice.

    x_ref, t_ref : (1, tile_r, 128) blocks of logits / targets (native dtype).
    num_ref/den_ref : (1, 1, 1, 1) per-(split,batch) partial sums, written at
                      the last tile of the reduction axis.
    num_acc/den_acc : (8, 128) f32 VMEM scratch (vreg-shaped partial sums).
    """
    ti = pl.program_id(2)
    tile_r = x_ref.shape[1]

    @pl.when(ti == 0)
    def _():
        num_acc[...] = jnp.zeros_like(num_acc)
        den_acc[...] = jnp.zeros_like(den_acc)

    x = x_ref[0].astype(jnp.float32)          # (tile_r, 128) logits, f32 compute
    t = t_ref[0].astype(jnp.float32)          # (tile_r, 128) targets

    pred = jax.nn.sigmoid(x)
    # TODO(synk): on v7x with bf16 end-to-end, 0.5*tanh(0.5*x)+0.5 and skipping
    # t*t for binary targets shave VPU/EUP work; unnecessary at f32 (DMA-bound).

    if mask_needed:
        # Element mask against the true per-sample element count. Applied to
        # pred AND t before any product so garbage in the over-covered tail
        # (or re-read clamped blocks) contributes exactly zero.
        row0 = (pl.program_id(0) * pl.num_programs(2) + ti) * tile_r
        row_ids = lax.broadcasted_iota(jnp.int32, (tile_r, LANES), 0) + row0
        lane_ids = lax.broadcasted_iota(jnp.int32, (tile_r, LANES), 1)
        valid = row_ids * LANES + lane_ids < n_valid
        pred = jnp.where(valid, pred, 0.0)
        t = jnp.where(valid, t, 0.0)

    if p == 2:
        pred_pow = pred * pred
        t_pow = t * t
    elif p == 1:
        pred_pow = pred
        t_pow = t
    else:
        pred_pow = jnp.power(pred, jnp.float32(p))
        t_pow = jnp.power(t, jnp.float32(p))

    num_part = pred * t
    den_part = pred_pow + t_pow

    # Reduce the tile down to a single (8, 128) vreg slab with pure VPU adds;
    # the cross-lane reduction happens only once per (split, batch).
    num_acc[...] += jnp.sum(num_part.reshape(-1, 8, LANES), axis=0)
    den_acc[...] += jnp.sum(den_part.reshape(-1, 8, LANES), axis=0)

    @pl.when(ti == pl.num_programs(2) - 1)
    def _():
        num_ref[...] = jnp.sum(num_acc[...]).reshape(1, 1, 1, 1)
        den_ref[...] = jnp.sum(den_acc[...]).reshape(1, 1, 1, 1)


def _dice_per_sample_ref(x2d, t2d, p):
    pred = jax.nn.sigmoid(x2d.astype(jnp.float32))
    tgt = t2d.astype(jnp.float32)
    num = jnp.sum(pred * tgt, axis=1)
    den = jnp.sum(pred ** p + tgt ** p, axis=1)
    return 1.0 - 2.0 * num / den


def _reduce(loss, reduction):
    if reduction == "mean":
        return jnp.mean(loss)
    elif reduction == "sum":
        return jnp.sum(loss)
    elif reduction == "none":
        return loss
    else:
        raise Exception("Unexpected reduction {}".format(reduction))


def binary_dice_loss(y_pred, y_true, smooth=1, p=2, reduction="mean",
                     tile_rows=TILE_ROWS, min_pallas_bytes=_MIN_PALLAS_BYTES):
    """Pallas implementation of BinaryDiceLoss.forward (sigmoid applied inside)."""
    assert y_pred.shape[0] == y_true.shape[0], \
        "predict & target batch size don't match"
    del smooth  # unused by the original PyTorch forward

    b = y_pred.shape[0]
    x = y_pred.reshape(b, -1)                 # native dtype; cast in-kernel
    t = y_true.reshape(b, -1)
    n = x.shape[1]

    rows = pl.cdiv(n, LANES)

    # Tiny or short-row inputs: XLA's fused reduction beats Pallas launch +
    # per-step overhead; zero risk, same math.
    if b * n * 4 < min_pallas_bytes or rows < _MIN_ROWS:
        return _reduce(_dice_per_sample_ref(x, t, p), reduction)

    # Lane-align each flattened sample to a multiple of 128 (rare path: most
    # C*H*W products already are). The in-kernel mask makes the pad value
    # irrelevant.
    lane_pad = rows * LANES - n
    if lane_pad:
        # TODO(synk): this materializes one copy of x/t; only hit when the
        # per-sample element count is not a multiple of 128.
        x = jnp.pad(x, ((0, 0), (0, lane_pad)))
        t = jnp.pad(t, ((0, 0), (0, lane_pad)))
    x = x.reshape(b, rows, LANES)
    t = t.reshape(b, rows, LANES)

    # Large, multi-MiB blocks; multiple of 32 sublanes (safe for packed
    # sub-32-bit target dtypes); never larger than the row count.
    tile_r = min(int(tile_rows), rows)
    tile_r = max(32, (tile_r // 32) * 32)
    n_tiles = pl.cdiv(rows, tile_r)

    # v7x has 2 TensorCores: with B == 1 the batch axis alone leaves one core
    # idle, so split the reduction axis into two parallel halves and combine
    # the partial (num, den) in the wrapper. Harmless on single-core chips.
    n_split = 2 if (b == 1 and n_tiles >= 2) else 1
    tiles_per_split = pl.cdiv(n_tiles, n_split)

    mask_needed = (lane_pad != 0) or (n_split * tiles_per_split * tile_r != rows)

    def in_index_map(s, bi, ti):
        # Clamp so a logically over-covering tile re-reads the last valid
        # block instead of going out of bounds; the element mask zeroes it.
        blk = jnp.minimum(s * tiles_per_split + ti, n_tiles - 1)
        return (bi, blk, 0)

    kernel = functools.partial(_dice_kernel, p=p, n_valid=n,
                               mask_needed=mask_needed)

    num_p, den_p = pl.pallas_call(
        kernel,
        out_shape=(jax.ShapeDtypeStruct((n_split, b, 1, 1), jnp.float32),
                   jax.ShapeDtypeStruct((n_split, b, 1, 1), jnp.float32)),
        grid=(n_split, b, tiles_per_split),
        in_specs=[
            pl.BlockSpec((1, tile_r, LANES), in_index_map),
            pl.BlockSpec((1, tile_r, LANES), in_index_map),
        ],
        out_specs=(
            pl.BlockSpec((1, 1, 1, 1), lambda s, bi, ti: (s, bi, 0, 0)),
            pl.BlockSpec((1, 1, 1, 1), lambda s, bi, ti: (s, bi, 0, 0)),
        ),
        scratch_shapes=[
            pltpu.VMEM((8, LANES), jnp.float32),   # num accumulator
            pltpu.VMEM((8, LANES), jnp.float32),   # den accumulator
        ],
        compiler_params=pltpu.CompilerParams(
            dimension_semantics=("parallel", "parallel", "arbitrary"),
            vmem_limit_bytes=32 << 20),
    )(x, t)

    num = jnp.sum(num_p[:, :, 0, 0], axis=0)       # (b,)
    den = jnp.sum(den_p[:, :, 0, 0], axis=0)       # (b,)
    loss = 1.0 - 2.0 * num / den
    return _reduce(loss, reduction)


def binary_dice_loss_ref(y_pred, y_true, smooth=1, p=2, reduction="mean"):
    """Pure-JAX reference mirroring the PyTorch forward (smooth unused there)."""
    b = y_pred.shape[0]
    return _reduce(_dice_per_sample_ref(y_pred.reshape(b, -1),
                                        y_true.reshape(b, -1), p), reduction)


if __name__ == "__main__":
    key = jax.random.PRNGKey(0)
    k1, k2, k3, k4, k5, k6 = jax.random.split(key, 6)

    # 1) Module-sized small input (2,4,16,16): wrapper takes the XLA fallback.
    yp_s = jax.random.normal(k1, (2, 4, 16, 16), dtype=jnp.float32)
    yt_s = jax.random.bernoulli(k2, p=0.3, shape=(2, 4, 16, 16)).astype(jnp.float32)
    out_s = jax.block_until_ready(binary_dice_loss(yp_s, yt_s))
    ref_s = binary_dice_loss_ref(yp_s, yt_s)
    assert jnp.allclose(out_s, ref_s, rtol=1e-4, atol=1e-6), (out_s, ref_s)

    # 2) Pallas path, lane-aligned, batch=2 (no masking needed).
    yp = jax.random.normal(k3, (2, 4, 64, 64), dtype=jnp.float32)
    yt = jax.random.bernoulli(k4, p=0.3, shape=(2, 4, 64, 64)).astype(jnp.float32)
    out = jax.block_until_ready(binary_dice_loss(yp, yt, min_pallas_bytes=0))
    ref = binary_dice_loss_ref(yp, yt)
    assert jnp.allclose(out, ref, rtol=1e-4, atol=1e-6), (out, ref)

    # 3) Pallas path, ragged + single-sample: exercises the lane pad, in-kernel
    #    element mask, the 2-way reduction-axis split, and the clamped tile.
    yp_r = jax.random.normal(k5, (1, 3, 100, 111), dtype=jnp.float32)
    yt_r = jax.random.bernoulli(k6, p=0.4, shape=(1, 3, 100, 111)).astype(jnp.float32)
    out_r = jax.block_until_ready(
        binary_dice_loss(yp_r, yt_r, min_pallas_bytes=0, tile_rows=64))
    ref_r = binary_dice_loss_ref(yp_r, yt_r)
    assert jnp.allclose(out_r, ref_r, rtol=1e-4, atol=1e-6), (out_r, ref_r)

    print("KERNEL_OK")
</pallas_src>

<mosaic_0001>
module attributes {stable_mosaic.version = 11 : i64} {
  func.func @_dice_kernel(%arg0: i32, %arg1: i32, %arg2: i32, %arg3: memref<1x128x128xf32, #tpu.memory_space<vmem>>, %arg4: memref<1x128x128xf32, #tpu.memory_space<vmem>>, %arg5: memref<1x1x1x1xf32, #tpu.memory_space<vmem>>, %arg6: memref<1x1x1x1xf32, #tpu.memory_space<vmem>>, %arg7: memref<8x128xf32, #tpu.memory_space<vmem>>, %arg8: memref<8x128xf32, #tpu.memory_space<vmem>>) attributes {dimension_semantics = [#tpu.dimension_semantics<parallel>, #tpu.dimension_semantics<parallel>, #tpu.dimension_semantics<arbitrary>], iteration_bounds = array<i64: 1, 2, 1>, scalar_prefetch = 0 : i64, scratch_operands = 2 : i64, tpu.core_type = #tpu.core_type<tc>, window_params = [{transform_indices = @transform_0, window_bounds = array<i64: 1, 128, 128>}, {transform_indices = @transform_1, window_bounds = array<i64: 1, 128, 128>}, {transform_indices = @transform_2, window_bounds = array<i64: 1, 1, 1, 1>}, {transform_indices = @transform_3, window_bounds = array<i64: 1, 1, 1, 1>}]} {
    %c0_i32 = arith.constant 0 : i32
    %0 = arith.cmpi eq, %arg2, %c0_i32 : i32
    %1 = arith.extui %0 : i1 to i32
    %c0_i32_0 = arith.constant 0 : i32
    %2 = arith.cmpi ne, %1, %c0_i32_0 : i32
    scf.if %2 {
      %cst_18 = arith.constant 0.000000e+00 : f32
      %29 = vector.broadcast %cst_18 : f32 to vector<8x128xf32>
      %c0_19 = arith.constant 0 : index
      %c0_20 = arith.constant 0 : index
      %30 = vector.load %arg7[%c0_19, %c0_20] : memref<8x128xf32, #tpu.memory_space<vmem>>, vector<8x128xf32>
      tpu.vector_store %arg7[%c0_19, %c0_20], %29 {strides = array<i32>} : memref<8x128xf32, #tpu.memory_space<vmem>>, vector<8x128xf32>,
      %cst_21 = arith.constant 0.000000e+00 : f32
      %31 = vector.broadcast %cst_21 : f32 to vector<8x128xf32>
      %c0_22 = arith.constant 0 : index
      %c0_23 = arith.constant 0 : index
      %32 = vector.load %arg8[%c0_22, %c0_23] : memref<8x128xf32, #tpu.memory_space<vmem>>, vector<8x128xf32>
      tpu.vector_store %arg8[%c0_22, %c0_23], %31 {strides = array<i32>} : memref<8x128xf32, #tpu.memory_space<vmem>>, vector<8x128xf32>,
    } else {
    }
    %c0 = arith.constant 0 : index
    %c0_1 = arith.constant 0 : index
    %c0_2 = arith.constant 0 : index
    %3 = vector.load %arg3[%c0, %c0_1, %c0_2] : memref<1x128x128xf32, #tpu.memory_space<vmem>>, vector<1x128x128xf32>
    %4 = vector.shape_cast %3 : vector<1x128x128xf32> to vector<128x128xf32>
    %c0_3 = arith.constant 0 : index
    %c0_4 = arith.constant 0 : index
    %c0_5 = arith.constant 0 : index
    %5 = vector.load %arg4[%c0_3, %c0_4, %c0_5] : memref<1x128x128xf32, #tpu.memory_space<vmem>>, vector<1x128x128xf32>
    %6 = vector.shape_cast %5 : vector<1x128x128xf32> to vector<128x128xf32>
    %7 = arith.negf %4 : vector<128x128xf32>
    %8 = math.exp %7 : vector<128x128xf32>
    %cst = arith.constant 1.000000e+00 : f32
    %9 = vector.broadcast %cst : f32 to vector<128x128xf32>
    %10 = arith.addf %9, %8 : vector<128x128xf32>
    %11 = arith.divf %9, %10 : vector<128x128xf32>
    %12 = arith.mulf %11, %11 : vector<128x128xf32>
    %13 = arith.mulf %6, %6 : vector<128x128xf32>
    %14 = arith.mulf %11, %6 : vector<128x128xf32>
    %15 = arith.addf %12, %13 : vector<128x128xf32>
    %c0_6 = arith.constant 0 : index
    %c0_7 = arith.constant 0 : index
    %16 = vector.load %arg7[%c0_6, %c0_7] : memref<8x128xf32, #tpu.memory_space<vmem>>, vector<8x128xf32>
    %17 = vector.shape_cast %14 : vector<128x128xf32> to vector<16x8x128xf32>
    %cst_8 = arith.constant dense<0.000000e+00> : vector<8x128xf32>
    %18 = vector.multi_reduction <add>, %17, %cst_8 [0] : vector<16x8x128xf32> to vector<8x128xf32>
    %19 = arith.addf %16, %18 : vector<8x128xf32>
    %c0_9 = arith.constant 0 : index
    %c0_10 = arith.constant 0 : index
    %20 = vector.load %arg7[%c0_9, %c0_10] : memref<8x128xf32, #tpu.memory_space<vmem>>, vector<8x128xf32>
    tpu.vector_store %arg7[%c0_9, %c0_10], %19 {strides = array<i32>} : memref<8x128xf32, #tpu.memory_space<vmem>>, vector<8x128xf32>,
    %c0_11 = arith.constant 0 : index
    %c0_12 = arith.constant 0 : index
    %21 = vector.load %arg8[%c0_11, %c0_12] : memref<8x128xf32, #tpu.memory_space<vmem>>, vector<8x128xf32>
    %22 = vector.shape_cast %15 : vector<128x128xf32> to vector<16x8x128xf32>
    %cst_13 = arith.constant dense<0.000000e+00> : vector<8x128xf32>
    %23 = vector.multi_reduction <add>, %22, %cst_13 [0] : vector<16x8x128xf32> to vector<8x128xf32>
    %24 = arith.addf %21, %23 : vector<8x128xf32>
    %c0_14 = arith.constant 0 : index
    %c0_15 = arith.constant 0 : index
    %25 = vector.load %arg8[%c0_14, %c0_15] : memref<8x128xf32, #tpu.memory_space<vmem>>, vector<8x128xf32>
    tpu.vector_store %arg8[%c0_14, %c0_15], %24 {strides = array<i32>} : memref<8x128xf32, #tpu.memory_space<vmem>>, vector<8x128xf32>,
    %c0_i32_16 = arith.constant 0 : i32
    %26 = arith.cmpi eq, %arg2, %c0_i32_16 : i32
    %27 = arith.extui %26 : i1 to i32
    %c0_i32_17 = arith.constant 0 : i32
    %28 = arith.cmpi ne, %27, %c0_i32_17 : i32
    scf.if %28 {
      %c0_18 = arith.constant 0 : index
      %c0_19 = arith.constant 0 : index
      %29 = vector.load %arg7[%c0_18, %c0_19] : memref<8x128xf32, #tpu.memory_space<vmem>>, vector<8x128xf32>
      %30 = vector.shape_cast %29 : vector<8x128xf32> to vector<1x8x128xf32>
      %cst_20 = arith.constant dense<0.000000e+00> : vector<1xf32>
      %31 = vector.multi_reduction <add>, %30, %cst_20 [1, 2] : vector<1x8x128xf32> to vector<1xf32>
      %32 = vector.shape_cast %31 : vector<1xf32> to vector<1x1x1xf32>
      %33 = vector.extract %32[0, 0, 0] : f32 from vector<1x1x1xf32>
      %34 = vector.broadcast %33 : f32 to vector<1x1x1x1xf32>
      %c0_21 = arith.constant 0 : index
      %c0_22 = arith.constant 0 : index
      %c0_23 = arith.constant 0 : index
      %c0_24 = arith.constant 0 : index
      %35 = vector.load %arg5[%c0_21, %c0_22, %c0_23, %c0_24] : memref<1x1x1x1xf32, #tpu.memory_space<vmem>>, vector<1x1x1x1xf32>
      tpu.vector_store %arg5[%c0_21, %c0_22, %c0_23, %c0_24], %34 {strides = array<i32>} : memref<1x1x1x1xf32, #tpu.memory_space<vmem>>, vector<1x1x1x1xf32>,
      %c0_25 = arith.constant 0 : index
      %c0_26 = arith.constant 0 : index
      %36 = vector.load %arg8[%c0_25, %c0_26] : memref<8x128xf32, #tpu.memory_space<vmem>>, vector<8x128xf32>
      %37 = vector.shape_cast %36 : vector<8x128xf32> to vector<1x8x128xf32>
      %cst_27 = arith.constant dense<0.000000e+00> : vector<1xf32>
      %38 = vector.multi_reduction <add>, %37, %cst_27 [1, 2] : vector<1x8x128xf32> to vector<1xf32>
      %39 = vector.shape_cast %38 : vector<1xf32> to vector<1x1x1xf32>
      %40 = vector.extract %39[0, 0, 0] : f32 from vector<1x1x1xf32>
      %41 = vector.broadcast %40 : f32 to vector<1x1x1x1xf32>
      %c0_28 = arith.constant 0 : index
      %c0_29 = arith.constant 0 : index
      %c0_30 = arith.constant 0 : index
      %c0_31 = arith.constant 0 : index
      %42 = vector.load %arg6[%c0_28, %c0_29, %c0_30, %c0_31] : memref<1x1x1x1xf32, #tpu.memory_space<vmem>>, vector<1x1x1x1xf32>
      tpu.vector_store %arg6[%c0_28, %c0_29, %c0_30, %c0_31], %41 {strides = array<i32>} : memref<1x1x1x1xf32, #tpu.memory_space<vmem>>, vector<1x1x1x1xf32>,
    } else {
    }
    return
  }
  func.func @transform_0(%arg0: i32, %arg1: i32, %arg2: i32) -> (i32, i32, i32) {
    %c1_i32 = arith.constant 1 : i32
    %0 = arith.muli %arg0, %c1_i32 : i32
    %1 = arith.addi %0, %arg2 : i32
    %c0_i32 = arith.constant 0 : i32
    %2 = arith.minsi %1, %c0_i32 : i32
    %c0_i32_0 = arith.constant 0 : i32
    %c0_i32_1 = arith.constant 0 : i32
    return %arg1, %2, %c0_i32_0 : i32, i32, i32
  }
  func.func @transform_1(%arg0: i32, %arg1: i32, %arg2: i32) -> (i32, i32, i32) {
    %c1_i32 = arith.constant 1 : i32
    %0 = arith.muli %arg0, %c1_i32 : i32
    %1 = arith.addi %0, %arg2 : i32
    %c0_i32 = arith.constant 0 : i32
    %2 = arith.minsi %1, %c0_i32 : i32
    %c0_i32_0 = arith.constant 0 : i32
    %c0_i32_1 = arith.constant 0 : i32
    return %arg1, %2, %c0_i32_0 : i32, i32, i32
  }
  func.func @transform_2(%arg0: i32, %arg1: i32, %arg2: i32) -> (i32, i32, i32, i32) {
    %c0_i32 = arith.constant 0 : i32
    %c0_i32_0 = arith.constant 0 : i32
    %c0_i32_1 = arith.constant 0 : i32
    return %arg0, %arg1, %c0_i32, %c0_i32_0 : i32, i32, i32, i32
  }
  func.func @transform_3(%arg0: i32, %arg1: i32, %arg2: i32) -> (i32, i32, i32, i32) {
    %c0_i32 = arith.constant 0 : i32
    %c0_i32_0 = arith.constant 0 : i32
    %c0_i32_1 = arith.constant 0 : i32
    return %arg0, %arg1, %c0_i32, %c0_i32_0 : i32, i32, i32, i32
  }
}

</mosaic_0001>

<llo_original>
// kernel: tpu_custom_call.1
$region0: #{tpu_custom_call.1}
  #allocation0 [shape = 'u32[]', space=smem, size = 0x4, offset = 0x4, fixed_abs, tag = 'smem constant byte address 0x4 - core index']
  #allocation1 [shape = 'u32[144,128]{1,0:T(1,128)}', space=vmem, size = 0x12000, scoped, tag = 'internal scratch']
  #allocation2 [shape = 'f32[8,128]{1,0:T(8,128)}', space=vmem, size = 0x1000, scoped, tag = 'scratch operand']
  #allocation3 [shape = 'f32[8,128]{1,0:T(8,128)}', space=vmem, size = 0x1000, scoped, tag = 'scratch operand']
  %s0 = inlined_call_operand.hbm [shape: f32[2,128,128], index: 0, kind: input, shape index: {}]
  %s1 = inlined_call_operand.hbm [shape: f32[2,128,128], index: 1, kind: input, shape index: {}]
  %s2 = inlined_call_operand.vmem [shape: f32[1,2,1,1], index: 2, kind: output, shape index: {0}]
  %s3 = inlined_call_operand.vmem [shape: f32[1,2,1,1], index: 3, kind: output, shape index: {1}]
  %4 = xla_tuple %s2, %s3
  %s5 = sld [smem:[#allocation0]]
  $region65: #{tpu_custom_call.1} parent=0
    _
  %s7 = ssub.s32 1, %s5
  %s8 = scalar_select 0, %s7, %s5
  $region1: #{tpu_custom_call.1} parent=0
    #allocation4 [shape = 'u8[131072]{0}', space=vmem, size = 0x20000, scoped, tag = 'input window, operand 0']
    #allocation5 [shape = 's32[2]{0}', space=sflag, size = 0x8, scoped, tag = 'scoped memory for tpu_custom_call.1']
    #allocation6 [shape = 'u8[131072]{0}', space=vmem, size = 0x20000, scoped, tag = 'input window, operand 1']
    #allocation7 [shape = 's32[2]{0}', space=sflag, size = 0x8, scoped, tag = 'scoped memory for tpu_custom_call.1']
    %9 = vsyncpa [#allocation5], 0
    %s10 = scalar_lea.sflag [#allocation5], 1
    %11 = vsyncpa %s10, 0
    %12 = vsyncpa [#allocation7], 0
    %s13 = scalar_lea.sflag [#allocation7], 1
    %14 = vsyncpa %s13, 0
    loop: start=0, step=1, limit=4
    $region2: #{tpu_custom_call.1} parent=1 // loop_pre_header
      _
    $region3: #{tpu_custom_call.1} parent=1 // loop_header
      %s16 = sphi 0, %s20
      %p17 = scmp.ge.s32.totalorder %s16, 4
      %s23 = sphi 0, %s42
      %s24 = sphi 0, %s38
      %s25 = sphi 0, %s34
      %s26 = sphi 0, %s23
      %s27 = sphi 0, %s24
      %s28 = sphi 0, %s25
      %s29 = sphi 0, %s26
      %s30 = sphi 0, %s27
      %s31 = sphi 0, %s28
      %s53 = sphi 0, %s55
      %s56 = sphi 0, %s53
      %s57 = sphi 0, %s56
      %s73 = sphi 0, %s57
      %s87 = sphi 0, %s89
      %s90 = sphi 0, %s87
      %s91 = sphi 0, %s90
      %s107 = sphi 0, %s91
      %s115 = sphi 0, %s117
      %s118 = sphi 0, %s115
      %s119 = sphi 0, %s118
      %s135 = sphi 0, %s119
      %s143 = sphi 0, %s145
      %s146 = sphi 0, %s143
      %s147 = sphi 0, %s146
      %s163 = sphi 0, %s147
    $region4: #{tpu_custom_call.1} parent=1 // loop_header_branch
      %19 = sbr.rel (%p17) target = $region8
    $region5: #{tpu_custom_call.1} parent=1 // loop_body
      %s21 = ssub.s32 %s16, 1
      %s22 = ssub.s32 %s16, 2
      %s32 = sadd.s32 1, %s25
      %p33 = scmp.ge.s32.totalorder %s32, 1
      %s34 = scalar_select %p33, 0, %s32
      %s35 = sadd.s32 1, %s24
      %s36 = scalar_select %p33, %s35, %s24
      %p37 = scmp.ge.s32.totalorder %s36, 2
      %s38 = scalar_select %p37, 0, %s36
      %s39 = sadd.s32 1, %s23
      %s40 = scalar_select %p37, %s39, %s23
      %p41 = scmp.ge.s32.totalorder %s40, 1
      %s42 = scalar_select %p41, 0, %s40
      %s43 = sadd.s32 %s23, %s25
      %p44 = scmp.lt.s32.totalorder %s43, 0
      %s45 = scalar_select %p44, %s43, 0
      %s46 = sadd.s32 %s42, %s34
      %p47 = scmp.lt.s32.totalorder %s46, 0
      %s48 = scalar_select %p47, %s46, 0
      %s49 = ssub.s32 %s24, %s38
      %s50 = ssub.s32 %s45, %s48
      %s51 = sor.u32 %s49, %s50
      %p52 = scmp.eq.s32.totalorder %s51, 0
      %s54 = sadd.s32 %s53, 1
      %s55 = scalar_select %p52, %s53, %s54
      %p58 = pneg %p52
      %p59 = scmp.eq.s32.totalorder %s16, 1
      %p60 = por %p58, %p59
      %p61 = scmp.ne.s32.totalorder %s53, %s56
      %p62 = scmp.eq.s32.totalorder %s16, 0
      %p63 = por %p61, %p62
      %p64 = scmp.ne.s32.totalorder %s53, %s56
      %p65 = scmp.eq.s32.totalorder %s21, 1
      %p66 = por %p64, %p65
      %p67 = scmp.ne.s32.totalorder %s56, %s57
      %p68 = scmp.eq.s32.totalorder %s21, 0
      %p69 = por %p67, %p68
      %p70 = scmp.ne.s32.totalorder %s56, %s57
      %p71 = scmp.eq.s32.totalorder %s22, 1
      %p72 = por %p70, %p71
      %p74 = scmp.ne.s32.totalorder %s57, %s73
      %p75 = scmp.eq.s32.totalorder %s22, 0
      %p76 = por %p74, %p75
      %s77 = sadd.s32 %s23, %s25
      %p78 = scmp.lt.s32.totalorder %s77, 0
      %s79 = scalar_select %p78, %s77, 0
      %s80 = sadd.s32 %s42, %s34
      %p81 = scmp.lt.s32.totalorder %s80, 0
      %s82 = scalar_select %p81, %s80, 0
      %s83 = ssub.s32 %s24, %s38
      %s84 = ssub.s32 %s79, %s82
      %s85 = sor.u32 %s83, %s84
      %p86 = scmp.eq.s32.totalorder %s85, 0
      %s88 = sadd.s32 %s87, 1
      %s89 = scalar_select %p86, %s87, %s88
      %p92 = pneg %p86
      %p93 = scmp.eq.s32.totalorder %s16, 1
      %p94 = por %p92, %p93
      %p95 = scmp.ne.s32.totalorder %s87, %s90
      %p96 = scmp.eq.s32.totalorder %s16, 0
      %p97 = por %p95, %p96
      %p98 = scmp.ne.s32.totalorder %s87, %s90
      %p99 = scmp.eq.s32.totalorder %s21, 1
      %p100 = por %p98, %p99
      %p101 = scmp.ne.s32.totalorder %s90, %s91
      %p102 = scmp.eq.s32.totalorder %s21, 0
      %p103 = por %p101, %p102
      %p104 = scmp.ne.s32.totalorder %s90, %s91
      %p105 = scmp.eq.s32.totalorder %s22, 1
      %p106 = por %p104, %p105
      %p108 = scmp.ne.s32.totalorder %s91, %s107
      %p109 = scmp.eq.s32.totalorder %s22, 0
      %p110 = por %p108, %p109
      %s111 = ssub.s32 %s23, %s42
      %s112 = ssub.s32 %s24, %s38
      %s113 = sor.u32 %s111, %s112
      %p114 = scmp.eq.s32.totalorder %s113, 0
      %s116 = sadd.s32 %s115, 1
      %s117 = scalar_select %p114, %s115, %s116
      %p120 = pneg %p114
      %p121 = scmp.eq.s32.totalorder %s16, 1
      %p122 = por %p120, %p121
      %p123 = scmp.ne.s32.totalorder %s115, %s118
      %p124 = scmp.eq.s32.totalorder %s16, 0
      %p125 = por %p123, %p124
      %p126 = scmp.ne.s32.totalorder %s115, %s118
      %p127 = scmp.eq.s32.totalorder %s21, 1
      %p128 = por %p126, %p127
      %p129 = scmp.ne.s32.totalorder %s118, %s119
      %p130 = scmp.eq.s32.totalorder %s21, 0
      %p131 = por %p129, %p130
      %p132 = scmp.ne.s32.totalorder %s118, %s119
      %p133 = scmp.eq.s32.totalorder %s22, 1
      %p134 = por %p132, %p133
      %p136 = scmp.ne.s32.totalorder %s119, %s135
      %p137 = scmp.eq.s32.totalorder %s22, 0
      %p138 = por %p136, %p137
      %s139 = ssub.s32 %s23, %s42
      %s140 = ssub.s32 %s24, %s38
      %s141 = sor.u32 %s139, %s140
      %p142 = scmp.eq.s32.totalorder %s141, 0
      %s144 = sadd.s32 %s143, 1
      %s145 = scalar_select %p142, %s143, %s144
      %p148 = pneg %p142
      %p149 = scmp.eq.s32.totalorder %s16, 1
      %p150 = por %p148, %p149
      %p151 = scmp.ne.s32.totalorder %s143, %s146
      %p152 = scmp.eq.s32.totalorder %s16, 0
      %p153 = por %p151, %p152
      %p154 = scmp.ne.s32.totalorder %s143, %s146
      %p155 = scmp.eq.s32.totalorder %s21, 1
      %p156 = por %p154, %p155
      %p157 = scmp.ne.s32.totalorder %s146, %s147
      %p158 = scmp.eq.s32.totalorder %s21, 0
      %p159 = por %p157, %p158
      %p160 = scmp.ne.s32.totalorder %s146, %s147
      %p161 = scmp.eq.s32.totalorder %s22, 1
      %p162 = por %p160, %p161
      %p164 = scmp.ne.s32.totalorder %s147, %s163
      %p165 = scmp.eq.s32.totalorder %s22, 0
      %p166 = por %p164, %p165
      %p167 = scmp.le.s32.totalorder 1, %s16
      %p168 = scmp.lt.s32.totalorder %s16, 3
      %p169 = pnand %p167, %p168
      %p170 = pneg %p169
      // Predicated region
      $region9: #{tpu_custom_call.1} parent=5 // pred_check
        _
      $region10: #{tpu_custom_call.1} parent=5 // pred_check_branch
        %172 = sbr.rel (%p169) target = $region12
      $region11: #{tpu_custom_call.1} parent=5 // pred_region
        %s173 = ssub.s32 %s16, 1
      $region12: #{tpu_custom_call.1} parent=5 // pred_fallthru
        _
      %p174 = scmp.lt.s32.totalorder %s16, 2
      // Predicated region
      $region13: #{tpu_custom_call.1} parent=5 // pred_check
        %p175 = pneg %p174
      $region14: #{tpu_custom_call.1} parent=5 // pred_check_branch
        %177 = sbr.rel (%p175) target = $region16
      $region15: #{tpu_custom_call.1} parent=5 // pred_region
        // Predicated region
        $region17: #{tpu_custom_call.1} parent=15 // pred_check
          %p178 = pneg %p63
        $region18: #{tpu_custom_call.1} parent=15 // pred_check_branch
          %180 = sbr.rel (%p178) target = $region20
        $region19: #{tpu_custom_call.1} parent=15 // pred_region
          %s181 = sand.u32 %s53, 1
          %s182 = scalar_lea.sflag [#allocation5], %s181
          %s183 = sand.u32 %s53, 1
          %s184 = smul.addr %s183, 128
          %s185 = scalar_lea.vmem [#allocation4], %s184
          %s186 = sadd.s32 %s23, %s25
          %p187 = scmp.lt.s32.totalorder %s186, 0
          %s188 = scalar_select %p187, %s186, 0
          %s189 = smul.u32 16, %s188
          %s191 = ssub.s32 2048, 2048
          %192 = vsyncadd %s182, %s191
          %s193 = smul.addr %s24, 16
          %s194 = sadd.s32 %s189, %s193
          %s195 = smul.addr %s194, 128
          %s196 = scalar_lea.hbm %s0, %s195
          %s197 = sshll.u32 %s185, 4
          %s198 = int_to_ptr.vmem [resolvable:$true] %s197
          %203 = dma.hbm_to_vmem [thread:$0]  %s196, 2048, %s198, %s182, 128, 128, 8
        $region20: #{tpu_custom_call.1} parent=15 // pred_fallthru
          _
        // Predicated region
        $region21: #{tpu_custom_call.1} parent=15 // pred_check
          %p204 = pneg %p97
        $region22: #{tpu_custom_call.1} parent=15 // pred_check_branch
          %206 = sbr.rel (%p204) target = $region24
        $region23: #{tpu_custom_call.1} parent=15 // pred_region
          %s207 = sand.u32 %s87, 1
          %s208 = scalar_lea.sflag [#allocation7], %s207
          %s209 = sand.u32 %s87, 1
          %s210 = smul.addr %s209, 128
          %s211 = scalar_lea.vmem [#allocation6], %s210
          %s212 = sadd.s32 %s23, %s25
          %p213 = scmp.lt.s32.totalorder %s212, 0
          %s214 = scalar_select %p213, %s212, 0
          %s215 = smul.u32 16, %s214
          %s217 = ssub.s32 2048, 2048
          %218 = vsyncadd %s208, %s217
          %s219 = smul.addr %s24, 16
          %s220 = sadd.s32 %s215, %s219
          %s221 = smul.addr %s220, 128
          %s222 = scalar_lea.hbm %s1, %s221
          %s223 = sshll.u32 %s211, 4
          %s224 = int_to_ptr.vmem [resolvable:$true] %s223
          %229 = dma.hbm_to_vmem [thread:$0]  %s222, 2048, %s224, %s208, 128, 128, 8
        $region24: #{tpu_custom_call.1} parent=15 // pred_fallthru
          _
      $region16: #{tpu_custom_call.1} parent=5 // pred_fallthru
        _
      %p230 = scmp.le.s32.totalorder 1, %s16
      %p231 = scmp.lt.s32.totalorder %s16, 3
      %p232 = pnand %p230, %p231
      %p233 = pneg %p232
      // Predicated region
      $region25: #{tpu_custom_call.1} parent=5 // pred_check
        _
      $region26: #{tpu_custom_call.1} parent=5 // pred_check_branch
        %235 = sbr.rel (%p232) target = $region28
      $region27: #{tpu_custom_call.1} parent=5 // pred_region
        %s236 = ssub.s32 %s16, 1
        %s237 = sand.u32 %s56, 1
        %s238 = scalar_lea.sflag [#allocation5], %s237
        %s239 = sand.u32 %s56, 1
        %s240 = smul.addr %s239, 128
        %s241 = scalar_lea.vmem [#allocation4], %s240
        // Predicated region
        $region29: #{tpu_custom_call.1} parent=27 // pred_check
          %p242 = pneg %p69
        $region30: #{tpu_custom_call.1} parent=27 // pred_check_branch
          %244 = sbr.rel (%p242) target = $region32
        $region31: #{tpu_custom_call.1} parent=27 // pred_region
          %245 = dma.done %s238, 2048
        $region32: #{tpu_custom_call.1} parent=27 // pred_fallthru
          _
        %s246 = sand.u32 %s90, 1
        %s247 = scalar_lea.sflag [#allocation7], %s246
        %s248 = sand.u32 %s90, 1
        %s249 = smul.addr %s248, 128
        %s250 = scalar_lea.vmem [#allocation6], %s249
        // Predicated region
        $region33: #{tpu_custom_call.1} parent=27 // pred_check
          %p251 = pneg %p103
        $region34: #{tpu_custom_call.1} parent=27 // pred_check_branch
          %253 = sbr.rel (%p251) target = $region36
        $region35: #{tpu_custom_call.1} parent=27 // pred_region
          %254 = dma.done %s247, 2048
        $region36: #{tpu_custom_call.1} parent=27 // pred_fallthru
          _
        %s255 = sand.u32 %s56, 1
        %s256 = scalar_lea.sflag [#allocation5], %s255
        %s257 = sand.u32 %s56, 1
        %s258 = smul.addr %s257, 128
        %s259 = scalar_lea.vmem [#allocation4], %s258
        %p260 = pneg %p69
        %p261 = pneg %p66
        %s262 = sand.u32 %s90, 1
        %s263 = scalar_lea.sflag [#allocation7], %s262
        %s264 = sand.u32 %s90, 1
        %s265 = smul.addr %s264, 128
        %s266 = scalar_lea.vmem [#allocation6], %s265
        %p267 = pneg %p103
        %p268 = pneg %p100
        %p269 = pneg %p131
        %p270 = pneg %p128
        %p271 = scmp.lt.s32.totalorder %s26, 0
        %s272 = scalar_select %p271, %s26, 0
        %p273 = scmp.lt.s32.totalorder %s27, 1
        %s274 = scalar_select %p273, %s27, 1
        %s275 = smul.addr %s272, 2
        %s276 = sadd.s32 %s274, %s275
        %s277 = scalar_lea.vmem %s2, %s276
        %p278 = pneg %p159
        %p279 = pneg %p156
        %p280 = scmp.lt.s32.totalorder %s26, 0
        %s281 = scalar_select %p280, %s26, 0
        %p282 = scmp.lt.s32.totalorder %s27, 1
        %s283 = scalar_select %p282, %s27, 1
        %s284 = smul.addr %s281, 2
        %s285 = sadd.s32 %s283, %s284
        %s286 = scalar_lea.vmem %s3, %s285
        %s287 = sadd.s32 %s26, %s28
        %p288 = scmp.lt.s32.totalorder %s287, 0
        %s289 = scalar_select %p288, %s287, 0
        %s290 = smul.u32 16, %s289
        %s291 = sadd.s32 %s26, %s28
        %p292 = scmp.lt.s32.totalorder %s291, 0
        %s293 = scalar_select %p292, %s291, 0
        %s294 = smul.u32 16, %s293
        %p295 = scmp.lt.s32.totalorder %s26, 0
        %s296 = scalar_select %p295, %s26, 0
        %p297 = scmp.lt.s32.totalorder %s27, 1
        %s298 = scalar_select %p297, %s27, 1
        %s299 = smul.addr %s296, 2
        %s300 = sadd.s32 %s298, %s299
        %s301 = scalar_lea.vmem %s2, %s300
        %p302 = scmp.lt.s32.totalorder %s26, 0
        %s303 = scalar_select %p302, %s26, 0
        %p304 = scmp.lt.s32.totalorder %s27, 1
        %s305 = scalar_select %p304, %s27, 1
        %s306 = smul.addr %s303, 2
        %s307 = sadd.s32 %s305, %s306
        %s308 = scalar_lea.vmem %s3, %s307
        %p309 = scmp.eq.s32.totalorder %s28, 0
        // Predicated region
        $region37: #{tpu_custom_call.1} parent=27 // pred_check
          %p310 = pneg %p309
        $region38: #{tpu_custom_call.1} parent=27 // pred_check_branch
          %312 = sbr.rel (%p310) target = $region40
        $region39: #{tpu_custom_call.1} parent=27 // pred_region
          %313 = vst [vmem:[#allocation2] sm:$0xff] 0.0
          %314 = vst [vmem:[#allocation3] sm:$0xff] 0.0
        $region40: #{tpu_custom_call.1} parent=27 // pred_fallthru
          _
        %v315 = vld [vmem:[%s241] sm:$0xff]
        %v316 = vld [vmem:[%s241 + $0x8] sm:$0xff]
        %v317 = vld [vmem:[%s241 + $0x10] sm:$0xff]
        %v318 = vld [vmem:[%s241 + $0x18] sm:$0xff]
        %v319 = vld [vmem:[%s241 + $0x20] sm:$0xff]
        %v320 = vld [vmem:[%s241 + $0x28] sm:$0xff]
        %v321 = vld [vmem:[%s241 + $0x30] sm:$0xff]
        %v322 = vld [vmem:[%s241 + $0x38] sm:$0xff]
        %v323 = vld [vmem:[%s241 + $0x40] sm:$0xff]
        %v324 = vld [vmem:[%s241 + $0x48] sm:$0xff]
        %v325 = vld [vmem:[%s241 + $0x50] sm:$0xff]
        %v326 = vld [vmem:[%s241 + $0x58] sm:$0xff]
        %v327 = vld [vmem:[%s241 + $0x60] sm:$0xff]
        %v328 = vld [vmem:[%s241 + $0x68] sm:$0xff]
        %v329 = vld [vmem:[%s241 + $0x70] sm:$0xff]
        %v330 = vld [vmem:[%s241 + $0x78] sm:$0xff]
        %v331 = vld [vmem:[%s250] sm:$0xff]
        %v332 = vld [vmem:[%s250 + $0x8] sm:$0xff]
        %v333 = vld [vmem:[%s250 + $0x10] sm:$0xff]
        %v334 = vld [vmem:[%s250 + $0x18] sm:$0xff]
        %v335 = vld [vmem:[%s250 + $0x20] sm:$0xff]
        %v336 = vld [vmem:[%s250 + $0x28] sm:$0xff]
        %v337 = vld [vmem:[%s250 + $0x30] sm:$0xff]
        %v338 = vld [vmem:[%s250 + $0x38] sm:$0xff]
        %v339 = vld [vmem:[%s250 + $0x40] sm:$0xff]
        %v340 = vld [vmem:[%s250 + $0x48] sm:$0xff]
        %v341 = vld [vmem:[%s250 + $0x50] sm:$0xff]
        %v342 = vld [vmem:[%s250 + $0x58] sm:$0xff]
        %v343 = vld [vmem:[%s250 + $0x60] sm:$0xff]
        %v344 = vld [vmem:[%s250 + $0x68] sm:$0xff]
        %v345 = vld [vmem:[%s250 + $0x70] sm:$0xff]
        %v346 = vld [vmem:[%s250 + $0x78] sm:$0xff]
        %v347 = vxor.u32 %v315, 2147483648
        %v348 = vxor.u32 %v316, 2147483648
        %v349 = vxor.u32 %v317, 2147483648
        %v350 = vxor.u32 %v318, 2147483648
        %v351 = vxor.u32 %v319, 2147483648
        %v352 = vxor.u32 %v320, 2147483648
        %v353 = vxor.u32 %v321, 2147483648
        %v354 = vxor.u32 %v322, 2147483648
        %v355 = vxor.u32 %v323, 2147483648
        %v356 = vxor.u32 %v324, 2147483648
        %v357 = vxor.u32 %v325, 2147483648
        %v358 = vxor.u32 %v326, 2147483648
        %v359 = vxor.u32 %v327, 2147483648
        %v360 = vxor.u32 %v328, 2147483648
        %v361 = vxor.u32 %v329, 2147483648
        %v362 = vxor.u32 %v330, 2147483648
        %v363 = vmul.f32 %v347, 1.442695
        %v364 = vpow.pop %v363
        %v365 = vmul.f32 %v348, 1.442695
        %v366 = vpow.pop %v365
        %v367 = vmul.f32 %v349, 1.442695
        %v368 = vpow.pop %v367
        %v369 = vmul.f32 %v350, 1.442695
        %v370 = vpow.pop %v369
        %v371 = vmul.f32 %v351, 1.442695
        %v372 = vpow.pop %v371
        %v373 = vmul.f32 %v352, 1.442695
        %v374 = vpow.pop %v373
        %v375 = vmul.f32 %v353, 1.442695
        %v376 = vpow.pop %v375
        %v377 = vmul.f32 %v354, 1.442695
        %v378 = vpow.pop %v377
        %v379 = vmul.f32 %v355, 1.442695
        %v380 = vpow.pop %v379
        %v381 = vmul.f32 %v356, 1.442695
        %v382 = vpow.pop %v381
        %v383 = vmul.f32 %v357, 1.442695
        %v384 = vpow.pop %v383
        %v385 = vmul.f32 %v358, 1.442695
        %v386 = vpow.pop %v385
        %v387 = vmul.f32 %v359, 1.442695
        %v388 = vpow.pop %v387
        %v389 = vmul.f32 %v360, 1.442695
        %v390 = vpow.pop %v389
        %v391 = vmul.f32 %v361, 1.442695
        %v392 = vpow.pop %v391
        %v393 = vmul.f32 %v362, 1.442695
        %v394 = vpow.pop %v393
        %v395 = vadd.f32 %v364, 1.0
        %v396 = vadd.f32 %v366, 1.0
        %v397 = vadd.f32 %v368, 1.0
        %v398 = vadd.f32 %v370, 1.0
        %v399 = vadd.f32 %v372, 1.0
        %v400 = vadd.f32 %v374, 1.0
        %v401 = vadd.f32 %v376, 1.0
        %v402 = vadd.f32 %v378, 1.0
        %v403 = vadd.f32 %v380, 1.0
        %v404 = vadd.f32 %v382, 1.0
        %v405 = vadd.f32 %v384, 1.0
        %v406 = vadd.f32 %v386, 1.0
        %v407 = vadd.f32 %v388, 1.0
        %v408 = vadd.f32 %v390, 1.0
        %v409 = vadd.f32 %v392, 1.0
        %v410 = vadd.f32 %v394, 1.0
        %v411 = vrcp.pop %v395
        %v412 = vmul.f32 1.0, %v411
        %v413 = vrcp.pop %v396
        %v414 = vmul.f32 1.0, %v413
        %v415 = vrcp.pop %v397
        %v416 = vmul.f32 1.0, %v415
        %v417 = vrcp.pop %v398
        %v418 = vmul.f32 1.0, %v417
        %v419 = vrcp.pop %v399
        %v420 = vmul.f32 1.0, %v419
        %v421 = vrcp.pop %v400
        %v422 = vmul.f32 1.0, %v421
        %v423 = vrcp.pop %v401
        %v424 = vmul.f32 1.0, %v423
        %v425 = vrcp.pop %v402
        %v426 = vmul.f32 1.0, %v425
        %v427 = vrcp.pop %v403
        %v428 = vmul.f32 1.0, %v427
        %v429 = vrcp.pop %v404
        %v430 = vmul.f32 1.0, %v429
        %v431 = vrcp.pop %v405
        %v432 = vmul.f32 1.0, %v431
        %v433 = vrcp.pop %v406
        %v434 = vmul.f32 1.0, %v433
        %v435 = vrcp.pop %v407
        %v436 = vmul.f32 1.0, %v435
        %v437 = vrcp.pop %v408
        %v438 = vmul.f32 1.0, %v437
        %v439 = vrcp.pop %v409
        %v440 = vmul.f32 1.0, %v439
        %v441 = vrcp.pop %v410
        %v442 = vmul.f32 1.0, %v441
        %v443 = vmul.f32 %v412, %v412
        %v444 = vmul.f32 %v414, %v414
        %v445 = vmul.f32 %v416, %v416
        %v446 = vmul.f32 %v418, %v418
        %v447 = vmul.f32 %v420, %v420
        %v448 = vmul.f32 %v422, %v422
        %v449 = vmul.f32 %v424, %v424
        %v450 = vmul.f32 %v426, %v426
        %v451 = vmul.f32 %v428, %v428
        %v452 = vmul.f32 %v430, %v430
        %v453 = vmul.f32 %v432, %v432
        %v454 = vmul.f32 %v434, %v434
        %v455 = vmul.f32 %v436, %v436
        %v456 = vmul.f32 %v438, %v438
        %v457 = vmul.f32 %v440, %v440
        %v458 = vmul.f32 %v442, %v442
        %v459 = vmul.f32 %v331, %v331
        %v460 = vmul.f32 %v332, %v332
        %v461 = vmul.f32 %v333, %v333
        %v462 = vmul.f32 %v334, %v334
        %v463 = vmul.f32 %v335, %v335
        %v464 = vmul.f32 %v336, %v336
        %v465 = vmul.f32 %v337, %v337
        %v466 = vmul.f32 %v338, %v338
        %v467 = vmul.f32 %v339, %v339
        %v468 = vmul.f32 %v340, %v340
        %v469 = vmul.f32 %v341, %v341
        %v470 = vmul.f32 %v342, %v342
        %v471 = vmul.f32 %v343, %v343
        %v472 = vmul.f32 %v344, %v344
        %v473 = vmul.f32 %v345, %v345
        %v474 = vmul.f32 %v346, %v346
        %v475 = vmul.f32 %v412, %v331
        %v476 = vmul.f32 %v414, %v332
        %v477 = vmul.f32 %v416, %v333
        %v478 = vmul.f32 %v418, %v334
        %v479 = vmul.f32 %v420, %v335
        %v480 = vmul.f32 %v422, %v336
        %v481 = vmul.f32 %v424, %v337
        %v482 = vmul.f32 %v426, %v338
        %v483 = vmul.f32 %v428, %v339
        %v484 = vmul.f32 %v430, %v340
        %v485 = vmul.f32 %v432, %v341
        %v486 = vmul.f32 %v434, %v342
        %v487 = vmul.f32 %v436, %v343
        %v488 = vmul.f32 %v438, %v344
        %v489 = vmul.f32 %v440, %v345
        %v490 = vmul.f32 %v442, %v346
        %v491 = vadd.f32 %v443, %v459
        %v492 = vadd.f32 %v444, %v460
        %v493 = vadd.f32 %v445, %v461
        %v494 = vadd.f32 %v446, %v462
        %v495 = vadd.f32 %v447, %v463
        %v496 = vadd.f32 %v448, %v464
        %v497 = vadd.f32 %v449, %v465
        %v498 = vadd.f32 %v450, %v466
        %v499 = vadd.f32 %v451, %v467
        %v500 = vadd.f32 %v452, %v468
        %v501 = vadd.f32 %v453, %v469
        %v502 = vadd.f32 %v454, %v470
        %v503 = vadd.f32 %v455, %v471
        %v504 = vadd.f32 %v456, %v472
        %v505 = vadd.f32 %v457, %v473
        %v506 = vadd.f32 %v458, %v474
        %v507 = vld [vmem:[#allocation2] sm:$0xff]
        %v508 = vadd.f32 %v475, %v476
        %v509 = vadd.f32 %v508, %v477
        %v510 = vadd.f32 %v509, %v478
        %v511 = vadd.f32 %v510, %v479
        %v512 = vadd.f32 %v511, %v480
        %v513 = vadd.f32 %v512, %v481
        %v514 = vadd.f32 %v513, %v482
        %v515 = vadd.f32 %v514, %v483
        %v516 = vadd.f32 %v515, %v484
        %v517 = vadd.f32 %v516, %v485
        %v518 = vadd.f32 %v517, %v486
        %v519 = vadd.f32 %v518, %v487
        %v520 = vadd.f32 %v519, %v488
        %v521 = vadd.f32 %v520, %v489
        %v522 = vadd.f32 %v521, %v490
        %v523 = vadd.f32 %v507, %v522
        %524 = vst [vmem:[#allocation2] sm:$0xff] %v523
        %v525 = vld [vmem:[#allocation3] sm:$0xff]
        %v526 = vadd.f32 %v491, %v492
        %v527 = vadd.f32 %v526, %v493
        %v528 = vadd.f32 %v527, %v494
        %v529 = vadd.f32 %v528, %v495
        %v530 = vadd.f32 %v529, %v496
        %v531 = vadd.f32 %v530, %v497
        %v532 = vadd.f32 %v531, %v498
        %v533 = vadd.f32 %v532, %v499
        %v534 = vadd.f32 %v533, %v500
        %v535 = vadd.f32 %v534, %v501
        %v536 = vadd.f32 %v535, %v502
        %v537 = vadd.f32 %v536, %v503
        %v538 = vadd.f32 %v537, %v504
        %v539 = vadd.f32 %v538, %v505
        %v540 = vadd.f32 %v539, %v506
        %v541 = vadd.f32 %v525, %v540
        %542 = vst [vmem:[#allocation3] sm:$0xff] %v541
        // Predicated region
        $region41: #{tpu_custom_call.1} parent=27 // pred_check
          %p543 = pneg %p309
        $region42: #{tpu_custom_call.1} parent=27 // pred_check_branch
          %545 = sbr.rel (%p543) target = $region44
        $region43: #{tpu_custom_call.1} parent=27 // pred_region
          %v546 = vld [vmem:[#allocation2] sm:$0xff]
          %547 = vadd.xlane.f32.xlu0 %v546
          %v548 = vpop.xlane.xlu0 %547
          %v549 = vrot.slane %v548, 4
          %v550 = vadd.f32 %v548, %v549
          %v551 = vrot.slane %v550, 2
          %v552 = vadd.f32 %v550, %v551
          %v553 = vrot.slane %v552, 1
          %v554 = vadd.f32 %v552, %v553
          %s555 = vtos %v554
          %v556 = vstv %s555
          %vm557 = vcmask 0
          %558 = vst.msk [vmem:[%s301] sm:$0x1] %vm557, %v556
          %v559 = vld [vmem:[#allocation3] sm:$0xff]
          %560 = vadd.xlane.f32.xlu0 %v559
          %v561 = vpop.xlane.xlu0 %560
          %v562 = vrot.slane %v561, 4
          %v563 = vadd.f32 %v561, %v562
          %v564 = vrot.slane %v563, 2
          %v565 = vadd.f32 %v563, %v564
          %v566 = vrot.slane %v565, 1
          %v567 = vadd.f32 %v565, %v566
          %s568 = vtos %v567
          %v569 = vstv %s568
          %570 = vst.msk [vmem:[%s308] sm:$0x1] %vm557, %v569
        $region44: #{tpu_custom_call.1} parent=27 // pred_fallthru
          _
        %p571 = scmp.lt.s32.totalorder %s26, 0
        %s572 = scalar_select %p571, %s26, 0
        %p573 = scmp.lt.s32.totalorder %s27, 1
        %s574 = scalar_select %p573, %s27, 1
        %s575 = smul.addr %s572, 2
        %s576 = sadd.s32 %s574, %s575
        %s577 = scalar_lea.vmem %s2, %s576
        %p578 = scmp.lt.s32.totalorder %s26, 0
        %s579 = scalar_select %p578, %s26, 0
        %p580 = scmp.lt.s32.totalorder %s27, 1
        %s581 = scalar_select %p580, %s27, 1
        %s582 = smul.addr %s579, 2
        %s583 = sadd.s32 %s581, %s582
        %s584 = scalar_lea.vmem %s3, %s583
        // Predicated region
        $region45: #{tpu_custom_call.1} parent=27 // pred_check
          %p585 = pneg %p128
        $region46: #{tpu_custom_call.1} parent=27 // pred_check_branch
          %587 = sbr.rel (%p585) target = $region48
        $region47: #{tpu_custom_call.1} parent=27 // pred_region
          _
        $region48: #{tpu_custom_call.1} parent=27 // pred_fallthru
          _
        // Predicated region
        $region49: #{tpu_custom_call.1} parent=27 // pred_check
          %p588 = pneg %p156
        $region50: #{tpu_custom_call.1} parent=27 // pred_check_branch
          %590 = sbr.rel (%p588) target = $region52
        $region51: #{tpu_custom_call.1} parent=27 // pred_region
          _
        $region52: #{tpu_custom_call.1} parent=27 // pred_fallthru
          _
      $region28: #{tpu_custom_call.1} parent=5 // pred_fallthru
        _
      %p591 = scmp.le.s32.totalorder 2, %s16
      // Predicated region
      $region53: #{tpu_custom_call.1} parent=5 // pred_check
        %p592 = pneg %p591
      $region54: #{tpu_custom_call.1} parent=5 // pred_check_branch
        %594 = sbr.rel (%p592) target = $region56
      $region55: #{tpu_custom_call.1} parent=5 // pred_region
        %s595 = ssub.s32 %s16, 2
        // Predicated region
        $region57: #{tpu_custom_call.1} parent=55 // pred_check
          %p596 = pneg %p134
        $region58: #{tpu_custom_call.1} parent=55 // pred_check_branch
          %598 = sbr.rel (%p596) target = $region60
        $region59: #{tpu_custom_call.1} parent=55 // pred_region
          %p599 = scmp.lt.s32.totalorder %s29, 0
          %s600 = scalar_select %p599, %s29, 0
          %p601 = scmp.lt.s32.totalorder %s30, 1
          %s602 = scalar_select %p601, %s30, 1
          %s603 = smul.addr %s600, 2
          %s604 = sadd.s32 %s602, %s603
          %s605 = scalar_lea.vmem %s2, %s604
        $region60: #{tpu_custom_call.1} parent=55 // pred_fallthru
          _
        // Predicated region
        $region61: #{tpu_custom_call.1} parent=55 // pred_check
          %p606 = pneg %p162
        $region62: #{tpu_custom_call.1} parent=55 // pred_check_branch
          %608 = sbr.rel (%p606) target = $region64
        $region63: #{tpu_custom_call.1} parent=55 // pred_region
          %p609 = scmp.lt.s32.totalorder %s29, 0
          %s610 = scalar_select %p609, %s29, 0
          %p611 = scmp.lt.s32.totalorder %s30, 1
          %s612 = scalar_select %p611, %s30, 1
          %s613 = smul.addr %s610, 2
          %s614 = sadd.s32 %s612, %s613
          %s615 = scalar_lea.vmem %s3, %s614
        $region64: #{tpu_custom_call.1} parent=55 // pred_fallthru
          _
      $region56: #{tpu_custom_call.1} parent=5 // pred_fallthru
        _
    $region6: #{tpu_custom_call.1} parent=1 // loop_footer
      %s20 = sadd.s32 1, %s16
    $region7: #{tpu_custom_call.1} parent=1 // loop_footer_branch
      %15 = sbr.rel target = $region3
    $region8: #{tpu_custom_call.1} parent=1 // loop_exit
      _
    %616 = vsyncpa [#allocation5], 1
    %s617 = scalar_lea.sflag [#allocation5], 1
    %618 = vsyncpa %s617, 1
    %619 = vsyncpa [#allocation7], 1
    %s620 = scalar_lea.sflag [#allocation7], 1
    %621 = vsyncpa %s620, 1

</llo_original>
